<compile_context>
chip_gen: v6e
topology: v6e:2x2x1
jax: 0.10.0
libtpu: 0.0.40
codegen_flags: <defaults>
</compile_context>

<pallas_src>
import functools
import math

import jax
import jax.numpy as jnp
from jax.experimental import pallas as pl
from jax.experimental.pallas import tpu as pltpu

_LANES = 128
_VMEM_DATA_BUDGET = 20 * 1024 * 1024     # target for the double-buffered blocks
_VMEM_LIMIT = 32 * 1024 * 1024           # scoped limit: fits v5e/v6e/v7x
_MAX_ROWS_TILE = 2048
_MIN_GRID_STEPS = 4                      # keep both TCs of a megacore part busy


def _mixture_kernel(idx_ref, packed_ref, seed_ref, out_ref, *,
                    nb_dist, channels, idx_channels, rows_tile, nstreams):
    # idx_ref:    (1, Ci, rows_tile, 128) int32  VMEM — class index map tile
    # packed_ref: (C*K,) int32 SMEM — bf16(mean) in high 16 bits, bf16(scale) low
    # seed_ref:   (1,)   int32 SMEM
    # out_ref:    (1, C, rows_tile, 128) VMEM
    b = pl.program_id(0)
    t = pl.program_id(1)

    shape2d = (rows_tile, _LANES)
    n_cpairs = (channels + 1) // 2

    # Per-element global counter, spatial-major (sublane = row, lane = column).
    row_i = jax.lax.broadcasted_iota(jnp.int32, shape2d, 0)
    lane_i = jax.lax.broadcasted_iota(jnp.int32, shape2d, 1)
    g = (t * rows_tile + row_i) * _LANES + lane_i          # global spatial id

    # Fold the user seed + batch stream offset in once per tile (hoisted out of
    # the channel-pair loop); per-draw stream offsets are a single vector add.
    seed_off = seed_ref[0] * jnp.int32(-1640531527)        # seed * golden-ratio
    base = g * jnp.int32(nstreams) + (b * jnp.int32(2 * n_cpairs) + seed_off)
    gbase = pltpu.bitcast(base, jnp.uint32)

    m1 = jnp.uint32(0x7FEB352D)
    m2 = jnp.uint32(0x846CA68B)
    one_bits = jnp.uint32(0x3F800000)
    two_pi = jnp.float32(2.0 * math.pi)
    hi_mask = jnp.int32(-65536)                            # 0xFFFF0000
    zero_i32 = jnp.zeros(shape2d, jnp.int32)               # hoisted splat

    def lowbias32(x):
        # murmur-style integer finalizer on uint32; >> is a logical shift.
        x = x ^ (x >> 16)
        x = x * m1
        x = x ^ (x >> 15)
        x = x * m2
        x = x ^ (x >> 16)
        return x

    def unit_f32(h):
        # top-23 hash bits as the mantissa of a float in [1, 2): no int->float
        # convert, no mask, no scale multiply.
        return pltpu.bitcast((h >> 9) | one_bits, jnp.float32)

    # Class masks — computed once per index channel and reused across output
    # channels (Ci == 1 is the common broadcast case).
    mask_cache = {}

    def class_masks(ci):
        if ci not in mask_cache:
            idx_c = idx_ref[0, ci]                         # (rows_tile, 128) int32
            mask_cache[ci] = [idx_c == k for k in range(nb_dist)]
        return mask_cache[ci]

    for cp in range(n_cpairs):
        c0 = 2 * cp
        c1 = c0 + 1

        # One Box-Muller evaluation feeds two channels (cos & sin outputs).
        h1 = lowbias32(gbase + jnp.uint32(2 * cp))
        h2 = lowbias32(gbase + jnp.uint32(2 * cp + 1))
        u1 = jnp.float32(2.0) - unit_f32(h1)               # (0, 1]  -> log finite
        r = jnp.sqrt(jnp.float32(-2.0) * jnp.log(u1))
        theta = two_pi * (unit_f32(h2) - jnp.float32(1.0)) # [0, 2*pi)
        z_list = [(c0, r * jnp.cos(theta))]
        if c1 < channels:
            z_list.append((c1, r * jnp.sin(theta)))

        for c, z in z_list:
            ci = c if idx_channels > 1 else 0
            masks = class_masks(ci)
            # Single packed select chain: K selects, then unpack mean/scale.
            packed_map = zero_i32
            for k in range(nb_dist):                       # K is small & static
                packed_map = jnp.where(masks[k], packed_ref[c * nb_dist + k],
                                       packed_map)
            mean_map = pltpu.bitcast(packed_map & hi_mask, jnp.float32)
            scale_map = pltpu.bitcast(packed_map << 16, jnp.float32)
            out_ref[0, c] = (mean_map + scale_map * z).astype(out_ref.dtype)


def _pack_mean_scale(means, scales):
    """Pack (mean, scale) as two bf16 halves of one int32 word per entry."""
    def bf16_bits(x):
        b = jax.lax.bitcast_convert_type(x.astype(jnp.bfloat16), jnp.uint16)
        return b.astype(jnp.uint32)
    packed = (bf16_bits(means) << 16) | bf16_bits(scales)
    return jax.lax.bitcast_convert_type(packed, jnp.int32)


def random_mixture(index, means, scales=1.0, *, seed=0, out_dtype=jnp.float32):
    """Pallas equivalent of RandomMixture.forward with Normal components.

    index     : (batch, 1 or C, *shape) integer class map.
    means     : (K,) or (C, K) component means.
    scales    : scalar, (K,) or (C, K) component standard deviations.
    out_dtype : output dtype (float32 default; bfloat16 halves HBM store traffic).
    Returns (batch, C, *shape) array of dtype `out_dtype`.
    """
    index = jnp.asarray(index).astype(jnp.int32)
    batch = index.shape[0]
    idx_channels = index.shape[1]
    shape = index.shape[2:]
    S = math.prod(shape) if shape else 1

    means = jnp.asarray(means, jnp.float32)
    scales = jnp.asarray(scales, jnp.float32)
    if means.ndim == 0:
        means = means[None]
    if scales.ndim == 0:
        scales = scales[None]
    if means.ndim == 1:
        means = means[None, :]
    if scales.ndim == 1:
        scales = scales[None, :]
    nb_dist = max(means.shape[1], scales.shape[1])
    chan_param = max(means.shape[0], scales.shape[0])
    if idx_channels > 1:
        if chan_param not in (1, idx_channels):
            raise ValueError('Channel shapes not consistent: {}'.format(
                [idx_channels, chan_param]))
        channel = idx_channels
    else:
        channel = chan_param
    means = jnp.broadcast_to(means, (channel, nb_dist))
    scales = jnp.broadcast_to(scales, (channel, nb_dist))
    packed = _pack_mean_scale(means, scales).reshape(-1)

    out_dtype = jnp.dtype(out_dtype)
    row_align = max(8, 32 // out_dtype.itemsize)           # (8,128) f32 / (16,128) bf16

    # --- spatial-major layout: flatten spatial, pad to (rows_tile, 128) tiles.
    # rows_tile is derived from an explicit VMEM budget (double-buffered index
    # + output blocks), capped at 2048, and shrunk only if needed so the grid
    # has >= _MIN_GRID_STEPS steps (megacore load-balance on v7x).
    rows = -(-S // _LANES)
    rows_needed = -(-rows // row_align) * row_align
    bytes_per_row = _LANES * (idx_channels * 4 + channel * out_dtype.itemsize)
    budget_rows = max(row_align,
                      (_VMEM_DATA_BUDGET // (2 * bytes_per_row)) // row_align * row_align)
    rows_tile = min(_MAX_ROWS_TILE, budget_rows, rows_needed)
    want_tiles = -(-_MIN_GRID_STEPS // max(batch, 1))
    if want_tiles > 1:
        balanced = max(row_align, (rows_needed // want_tiles) // row_align * row_align)
        rows_tile = min(rows_tile, balanced)
    n_tiles = -(-rows // rows_tile)
    rows_pad = n_tiles * rows_tile
    S_pad = rows_pad * _LANES

    idx_flat = index.reshape(batch, idx_channels, S)
    if S_pad != S:
        # padded voxels match no component -> stay 0, and are sliced off below
        idx_flat = jnp.pad(idx_flat, ((0, 0), (0, 0), (0, S_pad - S)),
                           constant_values=-1)
    idx4 = idx_flat.reshape(batch, idx_channels, rows_pad, _LANES)

    n_cpairs = (channel + 1) // 2
    nstreams = batch * 2 * n_cpairs
    seed_arr = jnp.asarray([seed], jnp.int32)

    kernel = functools.partial(
        _mixture_kernel, nb_dist=nb_dist, channels=channel,
        idx_channels=idx_channels, rows_tile=rows_tile, nstreams=nstreams)

    out = pl.pallas_call(
        kernel,
        out_shape=jax.ShapeDtypeStruct((batch, channel, rows_pad, _LANES),
                                       out_dtype),
        grid=(batch, n_tiles),
        in_specs=[
            pl.BlockSpec((1, idx_channels, rows_tile, _LANES),
                         lambda b, t: (b, 0, t, 0)),
            pl.BlockSpec(memory_space=pltpu.MemorySpace.SMEM),
            pl.BlockSpec(memory_space=pltpu.MemorySpace.SMEM),
        ],
        out_specs=pl.BlockSpec((1, channel, rows_tile, _LANES),
                               lambda b, t: (b, 0, t, 0)),
        compiler_params=pltpu.CompilerParams(
            dimension_semantics=("parallel", "parallel"),
            vmem_limit_bytes=_VMEM_LIMIT),
    )(idx4, packed, seed_arr)

    out = out.reshape(batch, channel, S_pad)[:, :, :S]
    return out.reshape(batch, channel, *shape)


if __name__ == "__main__":
    key = jax.random.PRNGKey(0)
    B, C, K, H, W = 2, 2, 4, 16, 16

    # Normal component parameters: per-channel means/scales, shape (C, K)
    means = jnp.arange(C * K, dtype=jnp.float32).reshape(C, K)
    scales = 0.05 + 0.05 * jnp.arange(C * K, dtype=jnp.float32).reshape(C, K)

    # integer class-index map (batch, 1, H, W), broadcast across channels
    index = jax.random.randint(key, (B, 1, H, W), 0, K)

    out = random_mixture(index, means, scales, seed=0)
    out = jax.block_until_ready(out)

    assert out.shape == (B, C, H, W), out.shape
    assert out.dtype == jnp.float32
    assert bool(jnp.all(jnp.isfinite(out)))

    # Reference check: out[b,c,v] must be means[c, idx] + scales[c, idx] * z
    # (component params are bf16-rounded in-kernel: <=0.4% relative tolerance)
    lbl = index[:, 0]                                       # (B, H, W)
    exp_mean = jnp.moveaxis(means[:, lbl], 0, 1)            # (B, C, H, W)
    exp_scale = jnp.moveaxis(scales[:, lbl], 0, 1)          # (B, C, H, W)
    zhat = (out - exp_mean) / exp_scale
    assert bool(jnp.all(jnp.abs(zhat) < 7.0))               # every sample within 7 sigma
    assert abs(float(zhat.mean())) < 0.2                    # standard-normal statistics
    assert abs(float(jnp.std(zhat)) - 1.0) < 0.2

    print("KERNEL_OK")
</pallas_src>

<mosaic_0001>
module attributes {stable_mosaic.version = 11 : i64} {
  func.func @_mixture_kernel(%arg0: i32, %arg1: i32, %arg2: memref<1x1x8x128xi32, #tpu.memory_space<vmem>>, %arg3: memref<8xi32, #tpu.memory_space<smem>>, %arg4: memref<1xi32, #tpu.memory_space<smem>>, %arg5: memref<1x2x8x128xf32, #tpu.memory_space<vmem>>) attributes {dimension_semantics = [#tpu.dimension_semantics<parallel>, #tpu.dimension_semantics<parallel>], iteration_bounds = array<i64: 2, 1>, scalar_prefetch = 0 : i64, scratch_operands = 0 : i64, tpu.core_type = #tpu.core_type<tc>, window_params = [{transform_indices = @transform_0, window_bounds = array<i64: 1, 1, 8, 128>}, {transform_indices = @transform_1, window_bounds = array<i64: 8>}, {transform_indices = @transform_2, window_bounds = array<i64: 1>}, {transform_indices = @transform_3, window_bounds = array<i64: 1, 2, 8, 128>}]} {
    %0 = tpu.iota {dimensions = array<i32: 0>} : vector<8x128xi32>
    %1 = tpu.iota {dimensions = array<i32: 1>} : vector<8x128xi32>
    %c8_i32 = arith.constant 8 : i32
    %2 = arith.muli %arg1, %c8_i32 : i32
    %3 = vector.broadcast %2 : i32 to vector<8x128xi32>
    %4 = arith.addi %3, %0 : vector<8x128xi32>
    %c128_i32 = arith.constant 128 : i32
    %5 = vector.broadcast %c128_i32 : i32 to vector<8x128xi32>
    %6 = arith.muli %4, %5 : vector<8x128xi32>
    %7 = arith.addi %6, %1 : vector<8x128xi32>
    %c0 = arith.constant 0 : index
    %8 = memref.load %arg4[%c0] : memref<1xi32, #tpu.memory_space<smem>>
    %c-1640531527_i32 = arith.constant -1640531527 : i32
    %9 = arith.muli %8, %c-1640531527_i32 : i32
    %c4_i32 = arith.constant 4 : i32
    %10 = vector.broadcast %c4_i32 : i32 to vector<8x128xi32>
    %11 = arith.muli %7, %10 : vector<8x128xi32>
    %c2_i32 = arith.constant 2 : i32
    %12 = arith.muli %arg0, %c2_i32 : i32
    %13 = arith.addi %12, %9 : i32
    %14 = vector.broadcast %13 : i32 to vector<8x128xi32>
    %15 = arith.addi %11, %14 : vector<8x128xi32>
    %16 = tpu.bitcast %15 : vector<8x128xi32> -> vector<8x128xi32>
    %c0_i32 = arith.constant 0 : i32
    %17 = vector.broadcast %c0_i32 : i32 to vector<8x128xi32>
    %c0_i32_0 = arith.constant 0 : i32
    %18 = vector.broadcast %c0_i32_0 : i32 to vector<8x128xi32>
    %19 = arith.addi %16, %18 : vector<8x128xi32>
    %c16_i32 = arith.constant 16 : i32
    %20 = vector.broadcast %c16_i32 : i32 to vector<8x128xi32>
    %21 = arith.shrui %19, %20 : vector<8x128xi32>
    %22 = arith.xori %19, %21 : vector<8x128xi32>
    %c2146121005_i32 = arith.constant 2146121005 : i32
    %23 = vector.broadcast %c2146121005_i32 : i32 to vector<8x128xi32>
    %24 = arith.muli %22, %23 : vector<8x128xi32>
    %c15_i32 = arith.constant 15 : i32
    %25 = vector.broadcast %c15_i32 : i32 to vector<8x128xi32>
    %26 = arith.shrui %24, %25 : vector<8x128xi32>
    %27 = arith.xori %24, %26 : vector<8x128xi32>
    %c-2073254261_i32 = arith.constant -2073254261 : i32
    %28 = vector.broadcast %c-2073254261_i32 : i32 to vector<8x128xi32>
    %29 = arith.muli %27, %28 : vector<8x128xi32>
    %c16_i32_1 = arith.constant 16 : i32
    %30 = vector.broadcast %c16_i32_1 : i32 to vector<8x128xi32>
    %31 = arith.shrui %29, %30 : vector<8x128xi32>
    %32 = arith.xori %29, %31 : vector<8x128xi32>
    %c1_i32 = arith.constant 1 : i32
    %33 = vector.broadcast %c1_i32 : i32 to vector<8x128xi32>
    %34 = arith.addi %16, %33 : vector<8x128xi32>
    %c16_i32_2 = arith.constant 16 : i32
    %35 = vector.broadcast %c16_i32_2 : i32 to vector<8x128xi32>
    %36 = arith.shrui %34, %35 : vector<8x128xi32>
    %37 = arith.xori %34, %36 : vector<8x128xi32>
    %c2146121005_i32_3 = arith.constant 2146121005 : i32
    %38 = vector.broadcast %c2146121005_i32_3 : i32 to vector<8x128xi32>
    %39 = arith.muli %37, %38 : vector<8x128xi32>
    %c15_i32_4 = arith.constant 15 : i32
    %40 = vector.broadcast %c15_i32_4 : i32 to vector<8x128xi32>
    %41 = arith.shrui %39, %40 : vector<8x128xi32>
    %42 = arith.xori %39, %41 : vector<8x128xi32>
    %c-2073254261_i32_5 = arith.constant -2073254261 : i32
    %43 = vector.broadcast %c-2073254261_i32_5 : i32 to vector<8x128xi32>
    %44 = arith.muli %42, %43 : vector<8x128xi32>
    %c16_i32_6 = arith.constant 16 : i32
    %45 = vector.broadcast %c16_i32_6 : i32 to vector<8x128xi32>
    %46 = arith.shrui %44, %45 : vector<8x128xi32>
    %47 = arith.xori %44, %46 : vector<8x128xi32>
    %c9_i32 = arith.constant 9 : i32
    %48 = vector.broadcast %c9_i32 : i32 to vector<8x128xi32>
    %49 = arith.shrui %32, %48 : vector<8x128xi32>
    %c1065353216_i32 = arith.constant 1065353216 : i32
    %50 = vector.broadcast %c1065353216_i32 : i32 to vector<8x128xi32>
    %51 = arith.ori %49, %50 : vector<8x128xi32>
    %52 = tpu.bitcast %51 : vector<8x128xi32> -> vector<8x128xf32>
    %cst = arith.constant 2.000000e+00 : f32
    %53 = vector.broadcast %cst : f32 to vector<8x128xf32>
    %54 = arith.subf %53, %52 : vector<8x128xf32>
    %55 = math.log %54 : vector<8x128xf32>
    %cst_7 = arith.constant -2.000000e+00 : f32
    %56 = vector.broadcast %cst_7 : f32 to vector<8x128xf32>
    %57 = arith.mulf %56, %55 : vector<8x128xf32>
    %58 = math.sqrt %57 : vector<8x128xf32>
    %c9_i32_8 = arith.constant 9 : i32
    %59 = vector.broadcast %c9_i32_8 : i32 to vector<8x128xi32>
    %60 = arith.shrui %47, %59 : vector<8x128xi32>
    %c1065353216_i32_9 = arith.constant 1065353216 : i32
    %61 = vector.broadcast %c1065353216_i32_9 : i32 to vector<8x128xi32>
    %62 = arith.ori %60, %61 : vector<8x128xi32>
    %63 = tpu.bitcast %62 : vector<8x128xi32> -> vector<8x128xf32>
    %cst_10 = arith.constant 1.000000e+00 : f32
    %64 = vector.broadcast %cst_10 : f32 to vector<8x128xf32>
    %65 = arith.subf %63, %64 : vector<8x128xf32>
    %cst_11 = arith.constant 6.28318548 : f32
    %66 = vector.broadcast %cst_11 : f32 to vector<8x128xf32>
    %67 = arith.mulf %66, %65 : vector<8x128xf32>
    %68 = math.cos %67 : vector<8x128xf32>
    %69 = arith.mulf %58, %68 : vector<8x128xf32>
    %70 = math.sin %67 : vector<8x128xf32>
    %71 = arith.mulf %58, %70 : vector<8x128xf32>
    %c0_12 = arith.constant 0 : index
    %c0_13 = arith.constant 0 : index
    %c0_14 = arith.constant 0 : index
    %c0_15 = arith.constant 0 : index
    %72 = vector.load %arg2[%c0_12, %c0_13, %c0_14, %c0_15] : memref<1x1x8x128xi32, #tpu.memory_space<vmem>>, vector<1x1x8x128xi32>
    %73 = vector.shape_cast %72 : vector<1x1x8x128xi32> to vector<8x128xi32>
    %c0_i32_16 = arith.constant 0 : i32
    %74 = vector.broadcast %c0_i32_16 : i32 to vector<8x128xi32>
    %75 = arith.cmpi eq, %73, %74 : vector<8x128xi32>
    %c1_i32_17 = arith.constant 1 : i32
    %76 = vector.broadcast %c1_i32_17 : i32 to vector<8x128xi32>
    %77 = arith.cmpi eq, %73, %76 : vector<8x128xi32>
    %c2_i32_18 = arith.constant 2 : i32
    %78 = vector.broadcast %c2_i32_18 : i32 to vector<8x128xi32>
    %79 = arith.cmpi eq, %73, %78 : vector<8x128xi32>
    %c3_i32 = arith.constant 3 : i32
    %80 = vector.broadcast %c3_i32 : i32 to vector<8x128xi32>
    %81 = arith.cmpi eq, %73, %80 : vector<8x128xi32>
    %c0_19 = arith.constant 0 : index
    %82 = memref.load %arg3[%c0_19] : memref<8xi32, #tpu.memory_space<smem>>
    %83 = vector.broadcast %82 : i32 to vector<8x128xi32>
    %84 = arith.select %75, %83, %17 : vector<8x128xi1>, vector<8x128xi32>
    %c1 = arith.constant 1 : index
    %85 = memref.load %arg3[%c1] : memref<8xi32, #tpu.memory_space<smem>>
    %86 = vector.broadcast %85 : i32 to vector<8x128xi32>
    %87 = arith.select %77, %86, %84 : vector<8x128xi1>, vector<8x128xi32>
    %c2 = arith.constant 2 : index
    %88 = memref.load %arg3[%c2] : memref<8xi32, #tpu.memory_space<smem>>
    %89 = vector.broadcast %88 : i32 to vector<8x128xi32>
    %90 = arith.select %79, %89, %87 : vector<8x128xi1>, vector<8x128xi32>
    %c3 = arith.constant 3 : index
    %91 = memref.load %arg3[%c3] : memref<8xi32, #tpu.memory_space<smem>>
    %92 = vector.broadcast %91 : i32 to vector<8x128xi32>
    %93 = arith.select %81, %92, %90 : vector<8x128xi1>, vector<8x128xi32>
    %c-65536_i32 = arith.constant -65536 : i32
    %94 = vector.broadcast %c-65536_i32 : i32 to vector<8x128xi32>
    %95 = arith.andi %93, %94 : vector<8x128xi32>
    %96 = tpu.bitcast %95 : vector<8x128xi32> -> vector<8x128xf32>
    %c16_i32_20 = arith.constant 16 : i32
    %97 = vector.broadcast %c16_i32_20 : i32 to vector<8x128xi32>
    %98 = arith.shli %93, %97 : vector<8x128xi32>
    %99 = tpu.bitcast %98 : vector<8x128xi32> -> vector<8x128xf32>
    %100 = arith.mulf %99, %69 : vector<8x128xf32>
    %101 = arith.addf %96, %100 : vector<8x128xf32>
    %c0_21 = arith.constant 0 : index
    %c0_22 = arith.constant 0 : index
    %c0_23 = arith.constant 0 : index
    %c0_24 = arith.constant 0 : index
    %102 = vector.load %arg5[%c0_21, %c0_22, %c0_23, %c0_24] : memref<1x2x8x128xf32, #tpu.memory_space<vmem>>, vector<1x1x8x128xf32>
    %103 = vector.shape_cast %102 : vector<1x1x8x128xf32> to vector<8x128xf32>
    %104 = vector.shape_cast %101 : vector<8x128xf32> to vector<1x1x8x128xf32>
    tpu.vector_store %arg5[%c0_21, %c0_22, %c0_23, %c0_24], %104 {strides = array<i32>} : memref<1x2x8x128xf32, #tpu.memory_space<vmem>>, vector<1x1x8x128xf32>,
    %c4 = arith.constant 4 : index
    %105 = memref.load %arg3[%c4] : memref<8xi32, #tpu.memory_space<smem>>
    %106 = vector.broadcast %105 : i32 to vector<8x128xi32>
    %107 = arith.select %75, %106, %17 : vector<8x128xi1>, vector<8x128xi32>
    %c5 = arith.constant 5 : index
    %108 = memref.load %arg3[%c5] : memref<8xi32, #tpu.memory_space<smem>>
    %109 = vector.broadcast %108 : i32 to vector<8x128xi32>
    %110 = arith.select %77, %109, %107 : vector<8x128xi1>, vector<8x128xi32>
    %c6 = arith.constant 6 : index
    %111 = memref.load %arg3[%c6] : memref<8xi32, #tpu.memory_space<smem>>
    %112 = vector.broadcast %111 : i32 to vector<8x128xi32>
    %113 = arith.select %79, %112, %110 : vector<8x128xi1>, vector<8x128xi32>
    %c7 = arith.constant 7 : index
    %114 = memref.load %arg3[%c7] : memref<8xi32, #tpu.memory_space<smem>>
    %115 = vector.broadcast %114 : i32 to vector<8x128xi32>
    %116 = arith.select %81, %115, %113 : vector<8x128xi1>, vector<8x128xi32>
    %c-65536_i32_25 = arith.constant -65536 : i32
    %117 = vector.broadcast %c-65536_i32_25 : i32 to vector<8x128xi32>
    %118 = arith.andi %116, %117 : vector<8x128xi32>
    %119 = tpu.bitcast %118 : vector<8x128xi32> -> vector<8x128xf32>
    %c16_i32_26 = arith.constant 16 : i32
    %120 = vector.broadcast %c16_i32_26 : i32 to vector<8x128xi32>
    %121 = arith.shli %116, %120 : vector<8x128xi32>
    %122 = tpu.bitcast %121 : vector<8x128xi32> -> vector<8x128xf32>
    %123 = arith.mulf %122, %71 : vector<8x128xf32>
    %124 = arith.addf %119, %123 : vector<8x128xf32>
    %c0_27 = arith.constant 0 : index
    %c1_28 = arith.constant 1 : index
    %c0_29 = arith.constant 0 : index
    %c0_30 = arith.constant 0 : index
    %125 = vector.load %arg5[%c0_27, %c1_28, %c0_29, %c0_30] : memref<1x2x8x128xf32, #tpu.memory_space<vmem>>, vector<1x1x8x128xf32>
    %126 = vector.shape_cast %125 : vector<1x1x8x128xf32> to vector<8x128xf32>
    %127 = vector.shape_cast %124 : vector<8x128xf32> to vector<1x1x8x128xf32>
    tpu.vector_store %arg5[%c0_27, %c1_28, %c0_29, %c0_30], %127 {strides = array<i32>} : memref<1x2x8x128xf32, #tpu.memory_space<vmem>>, vector<1x1x8x128xf32>,
    return
  }
  func.func @transform_0(%arg0: i32, %arg1: i32) -> (i32, i32, i32, i32) {
    %c0_i32 = arith.constant 0 : i32
    %c0_i32_0 = arith.constant 0 : i32
    %c0_i32_1 = arith.constant 0 : i32
    return %arg0, %c0_i32, %arg1, %c0_i32_0 : i32, i32, i32, i32
  }
  func.func @transform_1(%arg0: i32, %arg1: i32) -> i32 {
    %c0_i32 = arith.constant 0 : i32
    %c0_i32_0 = arith.constant 0 : i32
    return %c0_i32 : i32
  }
  func.func @transform_2(%arg0: i32, %arg1: i32) -> i32 {
    %c0_i32 = arith.constant 0 : i32
    %c0_i32_0 = arith.constant 0 : i32
    return %c0_i32 : i32
  }
  func.func @transform_3(%arg0: i32, %arg1: i32) -> (i32, i32, i32, i32) {
    %c0_i32 = arith.constant 0 : i32
    %c0_i32_0 = arith.constant 0 : i32
    %c0_i32_1 = arith.constant 0 : i32
    return %arg0, %c0_i32, %arg1, %c0_i32_0 : i32, i32, i32, i32
  }
}

</mosaic_0001>

<llo_original>
// kernel: tpu_custom_call.1
$region0: #{tpu_custom_call.1}
  #allocation0 [shape = 'u32[]', space=smem, size = 0x4, offset = 0x4, fixed_abs, tag = 'smem constant byte address 0x4 - core index']
  #allocation1 [shape = 'u32[144,128]{1,0:T(1,128)}', space=vmem, size = 0x12000, scoped, tag = 'internal scratch']
  #allocation2 [shape = 's32[1]{0:T(128)S(6)}', space=smem, size = 0x200, scoped, tag = 'scoped memory for tpu_custom_call.1']
  %s0 = inlined_call_operand.hbm [shape: s32[2,1,8,128], index: 0, kind: input, shape index: {}]
  %s1 = inlined_call_operand.vmem [shape: s32[8], index: 1, kind: input, shape index: {}]
  %s2 = inlined_call_operand.<no memory space> [shape: s32[1], index: 2, kind: input, shape index: {}]
  %s3 = inlined_call_operand.hbm [shape: f32[2,2,8,128], index: 3, kind: output, shape index: {}]
  %s4 = sld [smem:[#allocation0]]
  $region53: #{tpu_custom_call.1} parent=0
    _
  %s6 = ssub.s32 1, %s4
  %s7 = scalar_select 0, %s6, %s4
  %8 = sst [smem:[#allocation2]] %s2
  $region1: #{tpu_custom_call.1} parent=0
    #allocation3 [shape = 'u8[8192]{0}', space=vmem, size = 0x2000, scoped, tag = 'input window, operand 0']
    #allocation4 [shape = 's32[2]{0}', space=sflag, size = 0x8, scoped, tag = 'scoped memory for tpu_custom_call.1']
    #allocation5 [shape = 's32[2]{0}', space=sflag, size = 0x8, scoped, tag = 'scoped memory for tpu_custom_call.1']
    #allocation6 [shape = 's32[2]{0}', space=sflag, size = 0x8, scoped, tag = 'scoped memory for tpu_custom_call.1']
    #allocation7 [shape = 'u8[512]{0}', space=smem, size = 0x200, scoped, tag = 'input window, operand 1, single buffered']
    #allocation8 [shape = 'u8[16384]{0}', space=vmem, size = 0x4000, scoped, tag = 'output window, operand 0']
    %9 = vsyncpa [#allocation4], 0
    %s10 = scalar_lea.sflag [#allocation4], 1
    %11 = vsyncpa %s10, 0
    %12 = vsyncpa [#allocation6], 0
    %13 = vsyncpa [#allocation5], 0
    %s14 = scalar_lea.sflag [#allocation5], 1
    %15 = vsyncpa %s14, 0
    loop: start=0, step=1, limit=4
    $region2: #{tpu_custom_call.1} parent=1 // loop_pre_header
      _
    $region3: #{tpu_custom_call.1} parent=1 // loop_header
      %s17 = sphi 0, %s21
      %p18 = scmp.ge.s32.totalorder %s17, 4
      %s24 = sphi 0, %s36
      %s25 = sphi 0, %s32
      %s26 = sphi 0, %s24
      %s27 = sphi 0, %s25
      %s28 = sphi 0, %s26
      %s29 = sphi 0, %s27
      %s41 = sphi 0, %s43
      %s44 = sphi 0, %s41
      %s45 = sphi 0, %s44
      %s61 = sphi 0, %s45
      %s65 = sphi 0, %s65
      %s67 = sphi 0, %s65
      %s68 = sphi 0, %s67
      %s82 = sphi 0, %s68
      %s86 = sphi 0, %s86
      %s88 = sphi 0, %s86
      %s89 = sphi 0, %s88
      %s103 = sphi 0, %s89
      %s111 = sphi 0, %s113
      %s114 = sphi 0, %s111
      %s115 = sphi 0, %s114
      %s131 = sphi 0, %s115
    $region4: #{tpu_custom_call.1} parent=1 // loop_header_branch
      %20 = sbr.rel (%p18) target = $region8
    $region5: #{tpu_custom_call.1} parent=1 // loop_body
      %s22 = ssub.s32 %s17, 1
      %s23 = ssub.s32 %s17, 2
      %s30 = sadd.s32 1, %s25
      %p31 = scmp.ge.s32.totalorder %s30, 1
      %s32 = scalar_select %p31, 0, %s30
      %s33 = sadd.s32 1, %s24
      %s34 = scalar_select %p31, %s33, %s24
      %p35 = scmp.ge.s32.totalorder %s34, 2
      %s36 = scalar_select %p35, 0, %s34
      %s37 = ssub.s32 %s24, %s36
      %s38 = ssub.s32 %s25, %s32
      %s39 = sor.u32 %s37, %s38
      %p40 = scmp.eq.s32.totalorder %s39, 0
      %s42 = sadd.s32 %s41, 1
      %s43 = scalar_select %p40, %s41, %s42
      %p46 = pneg %p40
      %p47 = scmp.eq.s32.totalorder %s17, 1
      %p48 = por %p46, %p47
      %p49 = scmp.ne.s32.totalorder %s41, %s44
      %p50 = scmp.eq.s32.totalorder %s17, 0
      %p51 = por %p49, %p50
      %p52 = scmp.ne.s32.totalorder %s41, %s44
      %p53 = scmp.eq.s32.totalorder %s22, 1
      %p54 = por %p52, %p53
      %p55 = scmp.ne.s32.totalorder %s44, %s45
      %p56 = scmp.eq.s32.totalorder %s22, 0
      %p57 = por %p55, %p56
      %p58 = scmp.ne.s32.totalorder %s44, %s45
      %p59 = scmp.eq.s32.totalorder %s23, 1
      %p60 = por %p58, %p59
      %p62 = scmp.ne.s32.totalorder %s45, %s61
      %p63 = scmp.eq.s32.totalorder %s23, 0
      %p64 = por %p62, %p63
      %s66 = sadd.s32 %s65, 1
      %p69 = scmp.eq.s32.totalorder %s17, 1
      %p70 = scmp.ne.s32.totalorder %s65, %s67
      %p71 = scmp.eq.s32.totalorder %s17, 0
      %p72 = por %p70, %p71
      %p73 = scmp.ne.s32.totalorder %s65, %s67
      %p74 = scmp.eq.s32.totalorder %s22, 1
      %p75 = por %p73, %p74
      %p76 = scmp.ne.s32.totalorder %s67, %s68
      %p77 = scmp.eq.s32.totalorder %s22, 0
      %p78 = por %p76, %p77
      %p79 = scmp.ne.s32.totalorder %s67, %s68
      %p80 = scmp.eq.s32.totalorder %s23, 1
      %p81 = por %p79, %p80
      %p83 = scmp.ne.s32.totalorder %s68, %s82
      %p84 = scmp.eq.s32.totalorder %s23, 0
      %p85 = por %p83, %p84
      %s87 = sadd.s32 %s86, 1
      %p90 = scmp.eq.s32.totalorder %s17, 1
      %p91 = scmp.ne.s32.totalorder %s86, %s88
      %p92 = scmp.eq.s32.totalorder %s17, 0
      %p93 = por %p91, %p92
      %p94 = scmp.ne.s32.totalorder %s86, %s88
      %p95 = scmp.eq.s32.totalorder %s22, 1
      %p96 = por %p94, %p95
      %p97 = scmp.ne.s32.totalorder %s88, %s89
      %p98 = scmp.eq.s32.totalorder %s22, 0
      %p99 = por %p97, %p98
      %p100 = scmp.ne.s32.totalorder %s88, %s89
      %p101 = scmp.eq.s32.totalorder %s23, 1
      %p102 = por %p100, %p101
      %p104 = scmp.ne.s32.totalorder %s89, %s103
      %p105 = scmp.eq.s32.totalorder %s23, 0
      %p106 = por %p104, %p105
      %s107 = ssub.s32 %s24, %s36
      %s108 = ssub.s32 %s25, %s32
      %s109 = sor.u32 %s107, %s108
      %p110 = scmp.eq.s32.totalorder %s109, 0
      %s112 = sadd.s32 %s111, 1
      %s113 = scalar_select %p110, %s111, %s112
      %p116 = pneg %p110
      %p117 = scmp.eq.s32.totalorder %s17, 1
      %p118 = por %p116, %p117
      %p119 = scmp.ne.s32.totalorder %s111, %s114
      %p120 = scmp.eq.s32.totalorder %s17, 0
      %p121 = por %p119, %p120
      %p122 = scmp.ne.s32.totalorder %s111, %s114
      %p123 = scmp.eq.s32.totalorder %s22, 1
      %p124 = por %p122, %p123
      %p125 = scmp.ne.s32.totalorder %s114, %s115
      %p126 = scmp.eq.s32.totalorder %s22, 0
      %p127 = por %p125, %p126
      %p128 = scmp.ne.s32.totalorder %s114, %s115
      %p129 = scmp.eq.s32.totalorder %s23, 1
      %p130 = por %p128, %p129
      %p132 = scmp.ne.s32.totalorder %s115, %s131
      %p133 = scmp.eq.s32.totalorder %s23, 0
      %p134 = por %p132, %p133
      %p135 = scmp.le.s32.totalorder 1, %s17
      %p136 = scmp.lt.s32.totalorder %s17, 3
      %p137 = pnand %p135, %p136
      %p138 = pneg %p137
      // Predicated region
      $region9: #{tpu_custom_call.1} parent=5 // pred_check
        _
      $region10: #{tpu_custom_call.1} parent=5 // pred_check_branch
        %140 = sbr.rel (%p137) target = $region12
      $region11: #{tpu_custom_call.1} parent=5 // pred_region
        %s141 = ssub.s32 %s17, 1
        // Predicated region
        $region13: #{tpu_custom_call.1} parent=11 // pred_check
          %p142 = pneg %p78
        $region14: #{tpu_custom_call.1} parent=11 // pred_check_branch
          %144 = sbr.rel (%p142) target = $region16
        $region15: #{tpu_custom_call.1} parent=11 // pred_region
          %s146 = ssub.s32 16, 16
          %147 = vsyncadd [#allocation6], %s146
          %s149 = sshll.u32 %s1, 4
          %s150 = int_to_ptr.vmem [resolvable:$true] %s149
          %152 = dma.vmem_to_smem %s150, 16, [#allocation7], [#allocation6]
        $region16: #{tpu_custom_call.1} parent=11 // pred_fallthru
          _
        // Predicated region
        $region17: #{tpu_custom_call.1} parent=11 // pred_check
          %p153 = pneg %p99
        $region18: #{tpu_custom_call.1} parent=11 // pred_check_branch
          %155 = sbr.rel (%p153) target = $region20
        $region19: #{tpu_custom_call.1} parent=11 // pred_region
          _
        $region20: #{tpu_custom_call.1} parent=11 // pred_fallthru
          _
      $region12: #{tpu_custom_call.1} parent=5 // pred_fallthru
        _
      %p156 = scmp.lt.s32.totalorder %s17, 2
      // Predicated region
      $region21: #{tpu_custom_call.1} parent=5 // pred_check
        %p157 = pneg %p156
      $region22: #{tpu_custom_call.1} parent=5 // pred_check_branch
        %159 = sbr.rel (%p157) target = $region24
      $region23: #{tpu_custom_call.1} parent=5 // pred_region
        // Predicated region
        $region25: #{tpu_custom_call.1} parent=23 // pred_check
          %p160 = pneg %p51
        $region26: #{tpu_custom_call.1} parent=23 // pred_check_branch
          %162 = sbr.rel (%p160) target = $region28
        $region27: #{tpu_custom_call.1} parent=23 // pred_region
          %s163 = sand.u32 %s41, 1
          %s164 = scalar_lea.sflag [#allocation4], %s163
          %s165 = sand.u32 %s41, 1
          %s166 = smul.addr %s165, 8
          %s167 = scalar_lea.vmem [#allocation3], %s166
          %s169 = ssub.s32 128, 128
          %170 = vsyncadd %s164, %s169
          %s171 = sadd.s32 %s25, %s24
          %s172 = smul.addr %s171, 128
          %s173 = scalar_lea.hbm %s0, %s172
          %s175 = sshll.u32 %s167, 4
          %s176 = int_to_ptr.vmem [resolvable:$true] %s175
          %178 = dma.hbm_to_vmem [thread:$0]  %s173, 128, %s176, %s164
        $region28: #{tpu_custom_call.1} parent=23 // pred_fallthru
          _
      $region24: #{tpu_custom_call.1} parent=5 // pred_fallthru
        _
      %p179 = scmp.le.s32.totalorder 1, %s17
      %p180 = scmp.lt.s32.totalorder %s17, 3
      %p181 = pnand %p179, %p180
      %p182 = pneg %p181
      // Predicated region
      $region29: #{tpu_custom_call.1} parent=5 // pred_check
        _
      $region30: #{tpu_custom_call.1} parent=5 // pred_check_branch
        %184 = sbr.rel (%p181) target = $region32
      $region31: #{tpu_custom_call.1} parent=5 // pred_region
        %s185 = ssub.s32 %s17, 1
        %s186 = sand.u32 %s44, 1
        %s187 = scalar_lea.sflag [#allocation4], %s186
        %s188 = sand.u32 %s44, 1
        %s189 = smul.addr %s188, 8
        %s190 = scalar_lea.vmem [#allocation3], %s189
        // Predicated region
        $region33: #{tpu_custom_call.1} parent=31 // pred_check
          %p191 = pneg %p57
        $region34: #{tpu_custom_call.1} parent=31 // pred_check_branch
          %193 = sbr.rel (%p191) target = $region36
        $region35: #{tpu_custom_call.1} parent=31 // pred_region
          %194 = dma.done %s187, 128
        $region36: #{tpu_custom_call.1} parent=31 // pred_fallthru
          _
        // Predicated region
        $region37: #{tpu_custom_call.1} parent=31 // pred_check
          %p195 = pneg %p78
        $region38: #{tpu_custom_call.1} parent=31 // pred_check_branch
          %197 = sbr.rel (%p195) target = $region40
        $region39: #{tpu_custom_call.1} parent=31 // pred_region
          %198 = dma.done [#allocation6], 16
        $region40: #{tpu_custom_call.1} parent=31 // pred_fallthru
          _
        %199 = sfence
        %s200 = sand.u32 %s44, 1
        %s201 = scalar_lea.sflag [#allocation4], %s200
        %s202 = sand.u32 %s44, 1
        %s203 = smul.addr %s202, 8
        %s204 = scalar_lea.vmem [#allocation3], %s203
        %p205 = pneg %p57
        %p206 = pneg %p54
        %p207 = pneg %p78
        %p208 = pneg %p75
        %p209 = pneg %p99
        %p210 = pneg %p96
        %p211 = pneg %p127
        %p212 = pneg %p124
        %s213 = sand.u32 %s114, 1
        %s214 = scalar_lea.sflag [#allocation5], %s213
        %s215 = sand.u32 %s114, 1
        %s216 = smul.addr %s215, 16
        %s217 = scalar_lea.vmem [#allocation8], %s216
        %v218 = vlaneseq
        %v219 = vshrl.u32 %v218, 7
        %v220 = vlaneseq
        %v221 = vand.u32 %v220, 127
        %s222 = smul.u32 %s27, 8
        %v223 = vstv %s222
        %v224 = vadd.s32 %v223, %v219
        %v225 = vmul.u32 %v224, 128
        %v226 = vadd.s32 %v225, %v221
        %s227 = sld [smem:[#allocation2]]
        %s228 = smul.u32 %s227, 2654435769
        %v229 = vmul.u32 %v226, 4
        %s230 = smul.u32 %s26, 2
        %s231 = sadd.s32 %s230, %s228
        %v232 = vstv %s231
        %v233 = vadd.s32 %v229, %v232
        %v234 = vshrl.u32 %v233, 16
        %v235 = vxor.u32 %v233, %v234
        %v236 = vmul.u32 %v235, 2146121005
        %v237 = vshrl.u32 %v236, 15
        %v238 = vxor.u32 %v236, %v237
        %v239 = vmul.u32 %v238, 2221713035
        %v240 = vshrl.u32 %v239, 16
        %v241 = vxor.u32 %v239, %v240
        %v242 = vadd.s32 %v233, 1
        %v243 = vshrl.u32 %v242, 16
        %v244 = vxor.u32 %v242, %v243
        %v245 = vmul.u32 %v244, 2146121005
        %v246 = vshrl.u32 %v245, 15
        %v247 = vxor.u32 %v245, %v246
        %v248 = vmul.u32 %v247, 2221713035
        %v249 = vshrl.u32 %v248, 16
        %v250 = vxor.u32 %v248, %v249
        %v251 = vshrl.u32 %v241, 9
        %v252 = vor.u32 %v251, 1065353216
        %v254 = vsub.f32 2.0, %v252
        %v255 = vlog2.pop %v254
        %v256 = vmul.f32 %v255, 0.6931472
        %v257 = vmul.f32 %v256, -2.0
        %v258 = vrsqrt.pop %v257
        %v259 = vmul.f32 %v257, %v258
        %vm260 = vcmp.eq.f32.partialorder %v257, inf
        %v261 = vsel %vm260, %v257, %v259
        %vm262 = vcmp.eq.f32.partialorder %v257, 0.0
        %v263 = vand.u32 %v257, 2147483648
        %v264 = vsel %vm262, %v263, %v261
        %v265 = vshrl.u32 %v250, 9
        %v266 = vor.u32 %v265, 1065353216
        %v268 = vsub.f32 %v266, 1.0
        %v269 = vmul.f32 %v268, 6.2831855
        %v270 = vand.u32 2147483647, %v269
        %vm271 = vcmp.le.f32.partialorder %v270, 0.7853982
        %vm272 = vcmp.lt.s32.totalorder %v269, 0
        %v273 = vand.u32 %v269, 2139095040
        %v274 = vshrl.u32 %v273, 23
        %v275 = vsub.s32 %v274, 127
        %v276 = vand.u32 2147483647, %v269
        %v277 = vand.u32 %v276, 8388607
        %v278 = vor.u32 %v277, 8388608
        %v279 = vsub.s32 0, %v278
        %v280 = vadd.s32 %v275, 1
        %vm281 = vcmp.gt.s32.totalorder %v280, 0
        %v282 = vsel %vm281, %v280, 0
        %v283 = vshrl.u32 %v282, 5
        %v284 = vand.u32 %v282, 31
        %v285 = vsub.s32 32, %v284
        %v286 = vshrl.u32 683565275, %v285
        %v287 = vshll.u32 683565275, %v284
        %v288 = vshrl.u32 2475754826, %v285
        %v289 = vor.u32 %v287, %v288
        %v290 = vshll.u32 2475754826, %v284
        %v291 = vshrl.u32 2131351028, %v285
        %v292 = vor.u32 %v290, %v291
        %v293 = vshll.u32 2131351028, %v284
        %v294 = vshrl.u32 2102212464, %v285
        %v295 = vor.u32 %v293, %v294
        %v296 = vshll.u32 2102212464, %v284
        %v297 = vshrl.u32 920167782, %v285
        %v298 = vor.u32 %v296, %v297
        %v299 = vshll.u32 920167782, %v284
        %v300 = vshrl.u32 1326507024, %v285
        %v301 = vor.u32 %v299, %v300
        %vm302 = vcmp.lt.s32.totalorder %v283, 1
        %vm303 = vcmp.lt.s32.totalorder %v283, 2
        %vm304 = vcmp.lt.s32.totalorder %v283, 3
        %vm305 = vcmp.lt.s32.totalorder %v283, 4
        %v306 = vsel %vm302, %v286, %v289
        %v307 = vsel %vm305, %v295, 2102212464
        %v308 = vsel %vm304, %v292, %v307
        %v309 = vsel %vm303, %v306, %v308
        %v310 = vsel %vm302, %v289, %v292
        %v311 = vsel %vm305, %v298, 920167782
        %v312 = vsel %vm304, %v295, %v311
        %v313 = vsel %vm303, %v310, %v312
        %v314 = vsel %vm302, %v292, %v295
        %v315 = vsel %vm305, %v301, 1326507024
        %v316 = vsel %vm304, %v298, %v315
        %v317 = vsel %vm303, %v314, %v316
        %v318 = vshll.u32 %v278, 8
        %v319 = vmul.u32.u64.compose %v318, %v317
        %v320 = vextract.low.u32 %v319
        %v321 = vextract.high.u32 %v319
        %v322 = vmul.u32.u64.compose %v318, %v313
        %v323 = vextract.low.u32 %v322
        %v324 = vextract.high.u32 %v322
        %v325 = vmul.u32 %v318, %v309
        %v326 = vadd.s32 %v321, %v323
        %vm327 = vc.u32 %v321, %v323
        %v328 = vadd.s32 %v324, 1
        %v329 = vsel %vm327, %v328, %v324
        %v330 = vadd.s32 %v325, %v329
        %v331 = vadd.s32 %v330, 536870912
        %v332 = vshrl.u32 %v331, 30
        %v333 = vshll.u32 %v332, 30
        %v334 = vsub.s32 %v330, %v333
        %vm335 = vcmp.lt.s32.totalorder %v334, 0
        %v336 = vsub.s32 0, %v334
        %v337 = vsel %vm335, %v336, %v334
        %v338 = vclz %v337
        %v339 = vsub.s32 %v338, 2
        %vm340 = vcmp.gt.s32.totalorder 0, %v339
        %v341 = vsel %vm340, 0, %v339
        %v342 = vsub.s32 32, %v341
        %v343 = vshll.u32 %v334, %v341
        %v344 = vshrl.u32 %v326, %v342
        %v345 = vor.u32 %v343, %v344
        %v346 = vsub.s32 4294967266, %v341
        %v347 = vadd.s32 %v346, 127
        %v348 = vshll.u32 %v347, 23
        %v349 = vor.u32 4788187, %v348
        %v350 = vand.u32 2147483647, %v349
        %v352 = vcvt.s32.f32 %v345
        %v353 = vmul.f32 %v352, %v350
        %v354 = vxor.u32 %v353, 2147483648
        %v355 = vsel %vm272, %v354, %v353
        %v356 = vsub.s32 4, %v332
        %v357 = vsel %vm272, %v356, %v332
        %v358 = vsel %vm271, %v269, %v355
        %v359 = vsel %vm271, 0, %v357
        %v360 = vcosq.f32.pop %v358
        %v361 = vsinq.f32.pop %v358
        %vm362 = vweird.f32 %v269
        %v363 = vand.u32 %v359, 3
        %vm364 = vcmp.lt.s32.totalorder %v363, 2
        %vm365 = vcmp.eq.s32.totalorder %v363, 0
        %v366 = vxor.u32 %v361, 2147483648
        %v367 = vsel %vm365, %v360, %v366
        %vm368 = vcmp.eq.s32.totalorder %v363, 2
        %v369 = vxor.u32 %v360, 2147483648
        %v370 = vsel %vm368, %v369, %v361
        %v371 = vsel %vm364, %v367, %v370
        %v372 = vsel %vm362, nan, %v371
        %v373 = vmul.f32 %v264, %v372
        %v374 = vand.u32 2147483647, %v269
        %vm375 = vcmp.le.f32.partialorder %v374, 0.7853982
        %vm376 = vcmp.lt.s32.totalorder %v269, 0
        %v377 = vand.u32 %v269, 2139095040
        %v378 = vshrl.u32 %v377, 23
        %v379 = vsub.s32 %v378, 127
        %v380 = vand.u32 2147483647, %v269
        %v381 = vand.u32 %v380, 8388607
        %v382 = vor.u32 %v381, 8388608
        %v383 = vsub.s32 0, %v382
        %v384 = vadd.s32 %v379, 1
        %vm385 = vcmp.gt.s32.totalorder %v384, 0
        %v386 = vsel %vm385, %v384, 0
        %v387 = vshrl.u32 %v386, 5
        %v388 = vand.u32 %v386, 31
        %v389 = vsub.s32 32, %v388
        %v390 = vshrl.u32 683565275, %v389
        %v391 = vshll.u32 683565275, %v388
        %v392 = vshrl.u32 2475754826, %v389
        %v393 = vor.u32 %v391, %v392
        %v394 = vshll.u32 2475754826, %v388
        %v395 = vshrl.u32 2131351028, %v389
        %v396 = vor.u32 %v394, %v395
        %v397 = vshll.u32 2131351028, %v388
        %v398 = vshrl.u32 2102212464, %v389
        %v399 = vor.u32 %v397, %v398
        %v400 = vshll.u32 2102212464, %v388
        %v401 = vshrl.u32 920167782, %v389
        %v402 = vor.u32 %v400, %v401
        %v403 = vshll.u32 920167782, %v388
        %v404 = vshrl.u32 1326507024, %v389
        %v405 = vor.u32 %v403, %v404
        %vm406 = vcmp.lt.s32.totalorder %v387, 1
        %vm407 = vcmp.lt.s32.totalorder %v387, 2
        %vm408 = vcmp.lt.s32.totalorder %v387, 3
        %vm409 = vcmp.lt.s32.totalorder %v387, 4
        %v410 = vsel %vm406, %v390, %v393
        %v411 = vsel %vm409, %v399, 2102212464
        %v412 = vsel %vm408, %v396, %v411
        %v413 = vsel %vm407, %v410, %v412
        %v414 = vsel %vm406, %v393, %v396
        %v415 = vsel %vm409, %v402, 920167782
        %v416 = vsel %vm408, %v399, %v415
        %v417 = vsel %vm407, %v414, %v416
        %v418 = vsel %vm406, %v396, %v399
        %v419 = vsel %vm409, %v405, 1326507024
        %v420 = vsel %vm408, %v402, %v419
        %v421 = vsel %vm407, %v418, %v420
        %v422 = vshll.u32 %v382, 8
        %v423 = vmul.u32.u64.compose %v422, %v421
        %v424 = vextract.low.u32 %v423
        %v425 = vextract.high.u32 %v423
        %v426 = vmul.u32.u64.compose %v422, %v417
        %v427 = vextract.low.u32 %v426
        %v428 = vextract.high.u32 %v426
        %v429 = vmul.u32 %v422, %v413
        %v430 = vadd.s32 %v425, %v427
        %vm431 = vc.u32 %v425, %v427
        %v432 = vadd.s32 %v428, 1
        %v433 = vsel %vm431, %v432, %v428
        %v434 = vadd.s32 %v429, %v433
        %v435 = vadd.s32 %v434, 536870912
        %v436 = vshrl.u32 %v435, 30
        %v437 = vshll.u32 %v436, 30
        %v438 = vsub.s32 %v434, %v437
        %vm439 = vcmp.lt.s32.totalorder %v438, 0
        %v440 = vsub.s32 0, %v438
        %v441 = vsel %vm439, %v440, %v438
        %v442 = vclz %v441
        %v443 = vsub.s32 %v442, 2
        %vm444 = vcmp.gt.s32.totalorder 0, %v443
        %v445 = vsel %vm444, 0, %v443
        %v446 = vsub.s32 32, %v445
        %v447 = vshll.u32 %v438, %v445
        %v448 = vshrl.u32 %v430, %v446
        %v449 = vor.u32 %v447, %v448
        %v450 = vsub.s32 4294967266, %v445
        %v451 = vadd.s32 %v450, 127
        %v452 = vshll.u32 %v451, 23
        %v453 = vor.u32 4788187, %v452
        %v454 = vand.u32 2147483647, %v453
        %v456 = vcvt.s32.f32 %v449
        %v457 = vmul.f32 %v456, %v454
        %v458 = vxor.u32 %v457, 2147483648
        %v459 = vsel %vm376, %v458, %v457
        %v460 = vsub.s32 4, %v436
        %v461 = vsel %vm376, %v460, %v436
        %v462 = vsel %vm375, %v269, %v459
        %v463 = vsel %vm375, 0, %v461
        %v464 = vcosq.f32.pop %v462
        %v465 = vsinq.f32.pop %v462
        %vm466 = vweird.f32 %v269
        %v467 = vadd.s32 %v463, 3
        %v468 = vand.u32 %v467, 3
        %vm469 = vcmp.lt.s32.totalorder %v468, 2
        %vm470 = vcmp.eq.s32.totalorder %v468, 0
        %v471 = vxor.u32 %v465, 2147483648
        %v472 = vsel %vm470, %v464, %v471
        %vm473 = vcmp.eq.s32.totalorder %v468, 2
        %v474 = vxor.u32 %v464, 2147483648
        %v475 = vsel %vm473, %v474, %v465
        %v476 = vsel %vm469, %v472, %v475
        %v477 = vsel %vm466, nan, %v476
        %v478 = vmul.f32 %v264, %v477
        %v479 = vld [vmem:[%s190] sm:$0xff]
        %vm480 = vcmp.eq.s32.totalorder %v479, 0
        %vm481 = vcmp.eq.s32.totalorder %v479, 1
        %vm482 = vcmp.eq.s32.totalorder %v479, 2
        %vm483 = vcmp.eq.s32.totalorder %v479, 3
        %s484 = sld [smem:[#allocation7]]
        %v485 = vstv %s484
        %v486 = vsel %vm480, %v485, 0
        %s487 = sld [smem:[#allocation7 + $0x1]]
        %v488 = vstv %s487
        %v489 = vsel %vm481, %v488, %v486
        %s490 = sld [smem:[#allocation7 + $0x2]]
        %v491 = vstv %s490
        %v492 = vsel %vm482, %v491, %v489
        %s493 = sld [smem:[#allocation7 + $0x3]]
        %v494 = vstv %s493
        %v495 = vsel %vm483, %v494, %v492
        %v496 = vand.u32 %v495, 4294901760
        %v498 = vshll.u32 %v495, 16
        %v500 = vmul.f32 %v498, %v373
        %v501 = vadd.f32 %v496, %v500
        %502 = vst [vmem:[%s217] sm:$0xff] %v501
        %s503 = sld [smem:[#allocation7 + $0x4]]
        %v504 = vstv %s503
        %v505 = vsel %vm480, %v504, 0
        %s506 = sld [smem:[#allocation7 + $0x5]]
        %v507 = vstv %s506
        %v508 = vsel %vm481, %v507, %v505
        %s509 = sld [smem:[#allocation7 + $0x6]]
        %v510 = vstv %s509
        %v511 = vsel %vm482, %v510, %v508
        %s512 = sld [smem:[#allocation7 + $0x7]]
        %v513 = vstv %s512
        %v514 = vsel %vm483, %v513, %v511
        %v515 = vand.u32 %v514, 4294901760
        %v517 = vshll.u32 %v514, 16
        %v519 = vmul.f32 %v517, %v478
        %v520 = vadd.f32 %v515, %v519
        %s521 = scalar_lea.vmem %s217, 8 [#allocation8]
        %522 = vst [vmem:[%s521] sm:$0xff] %v520
        %s523 = sand.u32 %s114, 1
        %s524 = scalar_lea.sflag [#allocation5], %s523
        %s525 = sand.u32 %s114, 1
        %s526 = smul.addr %s525, 16
        %s527 = scalar_lea.vmem [#allocation8], %s526
        // Predicated region
        $region41: #{tpu_custom_call.1} parent=31 // pred_check
          %p528 = pneg %p124
        $region42: #{tpu_custom_call.1} parent=31 // pred_check_branch
          %530 = sbr.rel (%p528) target = $region44
        $region43: #{tpu_custom_call.1} parent=31 // pred_region
          %s532 = ssub.s32 256, 256
          %533 = vsyncadd %s524, %s532
          %s534 = smul.addr %s26, 2
          %s535 = sadd.s32 %s27, %s534
          %s536 = smul.addr %s535, 128
          %s537 = scalar_lea.hbm %s3, %s536
          %s538 = sshll.u32 %s527, 4
          %s539 = int_to_ptr.vmem [resolvable:$true] %s538
          %544 = dma.vmem_to_hbm [thread:$0]  %s539, 256, %s537, %s524, 128, 128, 8
        $region44: #{tpu_custom_call.1} parent=31 // pred_fallthru
          _
      $region32: #{tpu_custom_call.1} parent=5 // pred_fallthru
        _
      %p545 = scmp.le.s32.totalorder 2, %s17
      // Predicated region
      $region45: #{tpu_custom_call.1} parent=5 // pred_check
        %p546 = pneg %p545
      $region46: #{tpu_custom_call.1} parent=5 // pred_check_branch
        %548 = sbr.rel (%p546) target = $region48
      $region47: #{tpu_custom_call.1} parent=5 // pred_region
        %s549 = ssub.s32 %s17, 2
        // Predicated region
        $region49: #{tpu_custom_call.1} parent=47 // pred_check
          %p550 = pneg %p130
        $region50: #{tpu_custom_call.1} parent=47 // pred_check_branch
          %552 = sbr.rel (%p550) target = $region52
        $region51: #{tpu_custom_call.1} parent=47 // pred_region
          %s553 = sand.u32 %s115, 1
          %s554 = scalar_lea.sflag [#allocation5], %s553
          %s555 = sand.u32 %s115, 1
          %s556 = smul.addr %s555, 16
          %s557 = scalar_lea.vmem [#allocation8], %s556
          %558 = dma.done %s554, 256
        $region52: #{tpu_custom_call.1} parent=47 // pred_fallthru
          _
      $region48: #{tpu_custom_call.1} parent=5 // pred_fallthru
        _
    $region6: #{tpu_custom_call.1} parent=1 // loop_footer
      %s21 = sadd.s32 1, %s17
    $region7: #{tpu_custom_call.1} parent=1 // loop_footer_branch
      %16 = sbr.rel target = $region3
    $region8: #{tpu_custom_call.1} parent=1 // loop_exit
      _
    %559 = vsyncpa [#allocation4], 1
    %s560 = scalar_lea.sflag [#allocation4], 1
    %561 = vsyncpa %s560, 1
    %562 = vsyncpa [#allocation5], 1
    %s563 = scalar_lea.sflag [#allocation5], 1
    %564 = vsyncpa %s563, 1
    %565 = vsyncpa [#allocation6], 1
    %s566 = scalar_lea.sflag [#allocation6], 1
    %567 = vsyncpa %s566, 1

</llo_original>
